<compile_context>
chip_gen: v7x
topology: tpu7x:2x2x1
jax: 0.10.0
libtpu: 0.0.40
codegen_flags: <defaults>
</compile_context>

<pallas_src>
import functools

import jax
import jax.numpy as jnp
import numpy as np
from jax import lax
from jax.experimental import pallas as pl
from jax.experimental.pallas import tpu as pltpu


# ----------------------------------------------------------------------------
# Pallas kernel: fused (im2col + single conv matmul + bias + ReLU) per step
# ----------------------------------------------------------------------------
def _fused_conv_relu_kernel(x_ref, w_ref, b_ref, m_ref, o_ref, *, width, kh, kw):
    # x_ref : (B_TILE, Cin, H*W)   f32   (flattened NCHW slab for this tile)
    # w_ref : (Cout, kh*kw*Cin)    bf16  (prepacked conv weight, resident)
    # b_ref : (Cout, 1)            f32   (resident)
    # m_ref : (kh*kw, 1, H*W)      f32   (precomputed 0/1 boundary masks, resident)
    # o_ref : (B_TILE, Cout, H*W)  f32   (lane-dense: last dim = H*W)
    b_tile, cin, hw = x_ref.shape
    ktaps = kh * kw

    for b in range(b_tile):                              # small static unroll
        x = x_ref[b]                                     # (Cin, HW) f32
        taps = []
        for t in range(ktaps):                           # unrolled taps
            oh = t // kw - kh // 2                       # offsets in {-1,0,1}
            ow = t % kw - kw // 2
            src_off = oh * width + ow                    # flattened source offset
            # tap[p] = x[p + src_off]  (XLU lane rotation; wraps fixed by mask)
            tap = x if src_off == 0 else pltpu.roll(x, (-src_off) % hw, 1)
            if oh != 0 or ow != 0:
                tap = tap * m_ref[t]                     # zero the wrapped lanes
            taps.append(tap)
        # Stack taps along sublanes -> (kh*kw*Cin, HW), cast once to bf16, and
        # do a single (Cout, 36) x (36, HW) MXU matmul with f32 accumulation.
        slab = jnp.concatenate(taps, axis=0).astype(jnp.bfloat16)
        y = jnp.dot(w_ref[...], slab, preferred_element_type=jnp.float32)
        # f32 epilogue: bias + ReLU, lane-dense (Cout, H*W) store.
        o_ref[b] = jnp.maximum(y + b_ref[...], 0.0)


# ----------------------------------------------------------------------------
# Host-side helpers
# ----------------------------------------------------------------------------
def _pick_batch_tile(n, max_tile=8):
    """Largest divisor of n that is <= max_tile and keeps grid >= 2 when n >= 2
    (so v7x's two TensorCores both get work)."""
    if n <= 1:
        return 1
    best = 1
    for t in range(1, min(max_tile, n // 2) + 1):
        if n % t == 0:
            best = t
    return best


def _make_tap_masks(h, w, kh, kw):
    """0/1 masks marking lanes whose (row+oh, col+ow) source is in-bounds."""
    hw = h * w
    row = np.arange(hw) // w
    col = np.arange(hw) % w
    masks = np.zeros((kh * kw, 1, hw), np.float32)
    for t in range(kh * kw):
        oh = t // kw - kh // 2
        ow = t % kw - kw // 2
        valid = ((row + oh >= 0) & (row + oh < h) &
                 (col + ow >= 0) & (col + ow < w))
        masks[t, 0] = valid.astype(np.float32)
    return jnp.asarray(masks)


# ----------------------------------------------------------------------------
# Wrapper: AlamoModule.forward for the synthetic wrapped Conv2d+ReLU module
# ----------------------------------------------------------------------------
def alamo_forward(x_nchw, weight_oihw, bias):
    """x_nchw: (N, Cin, H, W) f32; weight: (Cout, Cin, 3, 3); bias: (Cout,).
    Returns (N, Cout, H, W) f32."""
    n, cin, h, w = x_nchw.shape
    cout, _, kh, kw = weight_oihw.shape
    hw = h * w
    ktaps = kh * kw

    # NCHW consumed directly as f32: flatten spatial (free, contiguous).
    # No transposes, no im2col in HBM, no wrapper-side dtype pass over x.
    x_flat = x_nchw.reshape(n, cin, hw)
    # Prepacked (Cout, kh*kw*Cin) weight: k index = tap*Cin + cin (tap-major),
    # matching the in-kernel slab stacking order.  Tiny host-side transform.
    w_packed = jnp.transpose(weight_oihw, (0, 2, 3, 1)).reshape(
        cout, ktaps * cin).astype(jnp.bfloat16)
    b_col = bias.reshape(cout, 1).astype(jnp.float32)
    masks = _make_tap_masks(h, w, kh, kw)

    b_tile = _pick_batch_tile(n)
    grid = (n // b_tile,)

    kernel = functools.partial(_fused_conv_relu_kernel, width=w, kh=kh, kw=kw)

    flops = 2 * n * hw * (ktaps * cin) * cout
    bytes_accessed = (x_flat.size * 4 + w_packed.size * 2 + b_col.size * 4
                      + masks.size * 4 + n * cout * hw * 4)

    out_flat = pl.pallas_call(
        kernel,
        out_shape=jax.ShapeDtypeStruct((n, cout, hw), jnp.float32),
        grid_spec=pltpu.PrefetchScalarGridSpec(
            num_scalar_prefetch=0,
            grid=grid,                                             # tile over batch
            in_specs=[
                pl.BlockSpec((b_tile, cin, hw), lambda i: (i, 0, 0)),
                pl.BlockSpec((cout, ktaps * cin), lambda i: (0, 0)),   # resident
                pl.BlockSpec((cout, 1), lambda i: (0, 0)),             # resident
                pl.BlockSpec((ktaps, 1, hw), lambda i: (0, 0, 0)),     # resident
            ],
            out_specs=pl.BlockSpec((b_tile, cout, hw), lambda i: (i, 0, 0)),
        ),
        compiler_params=pltpu.CompilerParams(
            dimension_semantics=("parallel",)),                    # v7x: 2 TCs
        cost_estimate=pl.CostEstimate(flops=flops,
                                      transcendentals=0,
                                      bytes_accessed=bytes_accessed),
    )(x_flat, w_packed, b_col, masks)

    # (N, Cout, H*W) -> (N, Cout, H, W): pure reshape, no transpose.
    return out_flat.reshape(n, cout, h, w)


def _reference(x_nchw, weight_oihw, bias):
    y = lax.conv_general_dilated(
        x_nchw, weight_oihw, window_strides=(1, 1), padding="SAME",
        dimension_numbers=("NCHW", "OIHW", "NCHW"))
    y = y + bias.reshape(1, -1, 1, 1)
    return jnp.maximum(y, 0.0)


if __name__ == "__main__":
    key = jax.random.PRNGKey(0)
    kx, kw_, kb = jax.random.split(key, 3)

    # small shapes consistent with the forward: batch=2, Cin=4, 16x16 spatial
    N, CIN, H, W = 2, 4, 16, 16
    COUT, KH, KW = 8, 3, 3

    x = jax.random.normal(kx, (N, CIN, H, W), dtype=jnp.float32)
    weight = jax.random.normal(kw_, (COUT, CIN, KH, KW), dtype=jnp.float32) * 0.1
    bias = jax.random.normal(kb, (COUT,), dtype=jnp.float32) * 0.1

    fwd = jax.jit(alamo_forward)
    out = jax.block_until_ready(fwd(x, weight, bias))
    ref = jax.block_until_ready(_reference(x, weight, bias))

    assert out.shape == (N, COUT, H, W)
    # bf16 MXU operands with f32 accumulation -> relax tolerance vs f32 ref.
    assert jnp.allclose(out, ref, atol=5e-2, rtol=5e-2), (
        float(jnp.max(jnp.abs(out - ref))))
    print("KERNEL_OK")
</pallas_src>

<mosaic_0001>
module attributes {stable_mosaic.version = 11 : i64} {
  func.func @_fused_conv_relu_kernel(%arg0: i32, %arg1: memref<1x4x256xf32, #tpu.memory_space<vmem>>, %arg2: memref<8x36xbf16, #tpu.memory_space<vmem>>, %arg3: memref<8x1xf32, #tpu.memory_space<vmem>>, %arg4: memref<9x1x256xf32, #tpu.memory_space<vmem>>, %arg5: memref<1x8x256xf32, #tpu.memory_space<vmem>>) attributes {dimension_semantics = [#tpu.dimension_semantics<parallel>], iteration_bounds = array<i64: 2>, scalar_prefetch = 0 : i64, scratch_operands = 0 : i64, tpu.core_type = #tpu.core_type<tc>, window_params = [{transform_indices = @transform_0, window_bounds = array<i64: 1, 4, 256>}, {pipeline_mode = #tpu.pipeline_mode<synchronous>, transform_indices = @transform_1, window_bounds = array<i64: 8, 36>}, {pipeline_mode = #tpu.pipeline_mode<synchronous>, transform_indices = @transform_2, window_bounds = array<i64: 8, 1>}, {pipeline_mode = #tpu.pipeline_mode<synchronous>, transform_indices = @transform_3, window_bounds = array<i64: 9, 1, 256>}, {transform_indices = @transform_4, window_bounds = array<i64: 1, 8, 256>}]} {
    %c0 = arith.constant 0 : index
    %c0_0 = arith.constant 0 : index
    %c0_1 = arith.constant 0 : index
    %0 = vector.load %arg1[%c0, %c0_0, %c0_1] : memref<1x4x256xf32, #tpu.memory_space<vmem>>, vector<1x4x256xf32>
    %1 = vector.shape_cast %0 : vector<1x4x256xf32> to vector<4x256xf32>
    %c17_i32 = arith.constant 17 : i32
    %2 = tpu.dynamic_rotate %1 by %c17_i32 dim 1 : vector<4x256xf32>, i32 -> vector<4x256xf32>
    %c0_2 = arith.constant 0 : index
    %c0_3 = arith.constant 0 : index
    %c0_4 = arith.constant 0 : index
    %3 = vector.load %arg4[%c0_2, %c0_3, %c0_4] : memref<9x1x256xf32, #tpu.memory_space<vmem>>, vector<1x1x256xf32>
    %4 = vector.shape_cast %3 : vector<1x1x256xf32> to vector<1x256xf32>
    %5 = vector.broadcast %4 : vector<1x256xf32> to vector<4x256xf32>
    %6 = arith.mulf %2, %5 : vector<4x256xf32>
    %c16_i32 = arith.constant 16 : i32
    %7 = tpu.dynamic_rotate %1 by %c16_i32 dim 1 : vector<4x256xf32>, i32 -> vector<4x256xf32>
    %c1 = arith.constant 1 : index
    %c0_5 = arith.constant 0 : index
    %c0_6 = arith.constant 0 : index
    %8 = vector.load %arg4[%c1, %c0_5, %c0_6] : memref<9x1x256xf32, #tpu.memory_space<vmem>>, vector<1x1x256xf32>
    %9 = vector.shape_cast %8 : vector<1x1x256xf32> to vector<1x256xf32>
    %10 = vector.broadcast %9 : vector<1x256xf32> to vector<4x256xf32>
    %11 = arith.mulf %7, %10 : vector<4x256xf32>
    %c15_i32 = arith.constant 15 : i32
    %12 = tpu.dynamic_rotate %1 by %c15_i32 dim 1 : vector<4x256xf32>, i32 -> vector<4x256xf32>
    %c2 = arith.constant 2 : index
    %c0_7 = arith.constant 0 : index
    %c0_8 = arith.constant 0 : index
    %13 = vector.load %arg4[%c2, %c0_7, %c0_8] : memref<9x1x256xf32, #tpu.memory_space<vmem>>, vector<1x1x256xf32>
    %14 = vector.shape_cast %13 : vector<1x1x256xf32> to vector<1x256xf32>
    %15 = vector.broadcast %14 : vector<1x256xf32> to vector<4x256xf32>
    %16 = arith.mulf %12, %15 : vector<4x256xf32>
    %c1_i32 = arith.constant 1 : i32
    %17 = tpu.dynamic_rotate %1 by %c1_i32 dim 1 : vector<4x256xf32>, i32 -> vector<4x256xf32>
    %c3 = arith.constant 3 : index
    %c0_9 = arith.constant 0 : index
    %c0_10 = arith.constant 0 : index
    %18 = vector.load %arg4[%c3, %c0_9, %c0_10] : memref<9x1x256xf32, #tpu.memory_space<vmem>>, vector<1x1x256xf32>
    %19 = vector.shape_cast %18 : vector<1x1x256xf32> to vector<1x256xf32>
    %20 = vector.broadcast %19 : vector<1x256xf32> to vector<4x256xf32>
    %21 = arith.mulf %17, %20 : vector<4x256xf32>
    %c255_i32 = arith.constant 255 : i32
    %22 = tpu.dynamic_rotate %1 by %c255_i32 dim 1 : vector<4x256xf32>, i32 -> vector<4x256xf32>
    %c5 = arith.constant 5 : index
    %c0_11 = arith.constant 0 : index
    %c0_12 = arith.constant 0 : index
    %23 = vector.load %arg4[%c5, %c0_11, %c0_12] : memref<9x1x256xf32, #tpu.memory_space<vmem>>, vector<1x1x256xf32>
    %24 = vector.shape_cast %23 : vector<1x1x256xf32> to vector<1x256xf32>
    %25 = vector.broadcast %24 : vector<1x256xf32> to vector<4x256xf32>
    %26 = arith.mulf %22, %25 : vector<4x256xf32>
    %c241_i32 = arith.constant 241 : i32
    %27 = tpu.dynamic_rotate %1 by %c241_i32 dim 1 : vector<4x256xf32>, i32 -> vector<4x256xf32>
    %c6 = arith.constant 6 : index
    %c0_13 = arith.constant 0 : index
    %c0_14 = arith.constant 0 : index
    %28 = vector.load %arg4[%c6, %c0_13, %c0_14] : memref<9x1x256xf32, #tpu.memory_space<vmem>>, vector<1x1x256xf32>
    %29 = vector.shape_cast %28 : vector<1x1x256xf32> to vector<1x256xf32>
    %30 = vector.broadcast %29 : vector<1x256xf32> to vector<4x256xf32>
    %31 = arith.mulf %27, %30 : vector<4x256xf32>
    %c240_i32 = arith.constant 240 : i32
    %32 = tpu.dynamic_rotate %1 by %c240_i32 dim 1 : vector<4x256xf32>, i32 -> vector<4x256xf32>
    %c7 = arith.constant 7 : index
    %c0_15 = arith.constant 0 : index
    %c0_16 = arith.constant 0 : index
    %33 = vector.load %arg4[%c7, %c0_15, %c0_16] : memref<9x1x256xf32, #tpu.memory_space<vmem>>, vector<1x1x256xf32>
    %34 = vector.shape_cast %33 : vector<1x1x256xf32> to vector<1x256xf32>
    %35 = vector.broadcast %34 : vector<1x256xf32> to vector<4x256xf32>
    %36 = arith.mulf %32, %35 : vector<4x256xf32>
    %c239_i32 = arith.constant 239 : i32
    %37 = tpu.dynamic_rotate %1 by %c239_i32 dim 1 : vector<4x256xf32>, i32 -> vector<4x256xf32>
    %c8 = arith.constant 8 : index
    %c0_17 = arith.constant 0 : index
    %c0_18 = arith.constant 0 : index
    %38 = vector.load %arg4[%c8, %c0_17, %c0_18] : memref<9x1x256xf32, #tpu.memory_space<vmem>>, vector<1x1x256xf32>
    %39 = vector.shape_cast %38 : vector<1x1x256xf32> to vector<1x256xf32>
    %40 = vector.broadcast %39 : vector<1x256xf32> to vector<4x256xf32>
    %41 = arith.mulf %37, %40 : vector<4x256xf32>
    %42 = tpu.concatenate %6, %11, %16, %21, %1, %26, %31, %36, %41 in 0 : vector<4x256xf32>, vector<4x256xf32>, vector<4x256xf32>, vector<4x256xf32>, vector<4x256xf32>, vector<4x256xf32>, vector<4x256xf32>, vector<4x256xf32>, vector<4x256xf32> -> vector<36x256xf32>
    %43 = arith.truncf %42 : vector<36x256xf32> to vector<36x256xbf16>
    %c0_19 = arith.constant 0 : index
    %c0_20 = arith.constant 0 : index
    %44 = vector.load %arg2[%c0_19, %c0_20] : memref<8x36xbf16, #tpu.memory_space<vmem>>, vector<8x36xbf16>
    %cst = arith.constant dense<0.000000e+00> : vector<8x256xf32>
    %45 = tpu.matmul %44, %43, %cst {dimension_numbers = #tpu.dot_dimension_numbers<[1], [0], [0], [1], [0, 0, 1, 1], [], []>} : vector<8x36xbf16>, vector<36x256xbf16>, vector<8x256xf32> -> vector<8x256xf32>
    %c0_21 = arith.constant 0 : index
    %c0_22 = arith.constant 0 : index
    %46 = vector.load %arg3[%c0_21, %c0_22] : memref<8x1xf32, #tpu.memory_space<vmem>>, vector<8x1xf32>
    %47 = vector.broadcast %46 : vector<8x1xf32> to vector<8x256xf32>
    %48 = arith.addf %45, %47 : vector<8x256xf32>
    %cst_23 = arith.constant 0.000000e+00 : f32
    %49 = vector.broadcast %cst_23 : f32 to vector<8x256xf32>
    %50 = arith.maximumf %48, %49 : vector<8x256xf32>
    %c0_24 = arith.constant 0 : index
    %c0_25 = arith.constant 0 : index
    %c0_26 = arith.constant 0 : index
    %51 = vector.load %arg5[%c0_24, %c0_25, %c0_26] : memref<1x8x256xf32, #tpu.memory_space<vmem>>, vector<1x8x256xf32>
    %52 = vector.shape_cast %51 : vector<1x8x256xf32> to vector<8x256xf32>
    %53 = vector.shape_cast %50 : vector<8x256xf32> to vector<1x8x256xf32>
    tpu.vector_store %arg5[%c0_24, %c0_25, %c0_26], %53 {strides = array<i32>} : memref<1x8x256xf32, #tpu.memory_space<vmem>>, vector<1x8x256xf32>,
    return
  }
  func.func @transform_0(%arg0: i32) -> (i32, i32, i32) {
    %c0_i32 = arith.constant 0 : i32
    %c0_i32_0 = arith.constant 0 : i32
    %c0_i32_1 = arith.constant 0 : i32
    return %arg0, %c0_i32, %c0_i32_0 : i32, i32, i32
  }
  func.func @transform_1(%arg0: i32) -> (i32, i32) {
    %c0_i32 = arith.constant 0 : i32
    %c0_i32_0 = arith.constant 0 : i32
    %c0_i32_1 = arith.constant 0 : i32
    return %c0_i32, %c0_i32_0 : i32, i32
  }
  func.func @transform_2(%arg0: i32) -> (i32, i32) {
    %c0_i32 = arith.constant 0 : i32
    %c0_i32_0 = arith.constant 0 : i32
    %c0_i32_1 = arith.constant 0 : i32
    return %c0_i32, %c0_i32_0 : i32, i32
  }
  func.func @transform_3(%arg0: i32) -> (i32, i32, i32) {
    %c0_i32 = arith.constant 0 : i32
    %c0_i32_0 = arith.constant 0 : i32
    %c0_i32_1 = arith.constant 0 : i32
    %c0_i32_2 = arith.constant 0 : i32
    return %c0_i32, %c0_i32_0, %c0_i32_1 : i32, i32, i32
  }
  func.func @transform_4(%arg0: i32) -> (i32, i32, i32) {
    %c0_i32 = arith.constant 0 : i32
    %c0_i32_0 = arith.constant 0 : i32
    %c0_i32_1 = arith.constant 0 : i32
    return %arg0, %c0_i32, %c0_i32_0 : i32, i32, i32
  }
}

</mosaic_0001>

<llo_original>
// kernel: alamo_forward.1
$region0: #{alamo_forward.1}
  #allocation0 [shape = 'u32[]', space=smem, size = 0x4, offset = 0x4, fixed_abs, tag = 'smem constant byte address 0x4 - core index']
  #allocation1 [shape = 'u32[144,128]{1,0:T(1,128)}', space=vmem, size = 0x12000, scoped, tag = 'internal scratch']
  %s0 = inlined_call_operand.vmem [shape: f32[2,4,256], index: 0, kind: input, shape index: {}]
  %s1 = inlined_call_operand.vmem [shape: bf16[8,36], index: 1, kind: input, shape index: {}]
  %s2 = inlined_call_operand.vmem [shape: f32[8,1], index: 2, kind: input, shape index: {}]
  %s3 = inlined_call_operand.vmem [shape: f32[9,1,256], index: 3, kind: input, shape index: {}]
  %s4 = inlined_call_operand.vmem [shape: f32[2,8,256], index: 4, kind: output, shape index: {}]
  %s5 = sld [smem:[#allocation0]]
  $region49: #{alamo_forward.1} parent=0
    _
  %s7 = ssub.s32 1, %s5
  %s8 = scalar_select 0, %s7, %s5
  loop: start=0, step=1, limit=4
  $region2: #{alamo_forward.1} parent=0 // loop_pre_header
    _
  $region3: #{alamo_forward.1} parent=0 // loop_header
    %s10 = sphi 0, %s14
    %p11 = scmp.ge.s32.totalorder %s10, 4
    %s20 = sphi 0, %s22
    %s23 = sphi 0, %s20
    %s24 = sphi 0, %s23
    %s40 = sphi 0, %s24
    %s44 = sphi 0, %s44
    %s46 = sphi 0, %s44
    %s47 = sphi 0, %s46
    %s61 = sphi 0, %s47
    %s65 = sphi 0, %s65
    %s67 = sphi 0, %s65
    %s68 = sphi 0, %s67
    %s82 = sphi 0, %s68
    %s86 = sphi 0, %s86
    %s88 = sphi 0, %s86
    %s89 = sphi 0, %s88
    %s103 = sphi 0, %s89
    %s109 = sphi 0, %s111
    %s112 = sphi 0, %s109
    %s113 = sphi 0, %s112
    %s129 = sphi 0, %s113
  $region4: #{alamo_forward.1} parent=0 // loop_header_branch
    %13 = sbr.rel (%p11) target = $region8
  $region5: #{alamo_forward.1} parent=0 // loop_body
    %s15 = ssub.s32 %s10, 1
    %s16 = ssub.s32 %s10, 2
    %s17 = sadd.s32 %s10, 1
    %s18 = ssub.s32 %s10, %s17
    %p19 = scmp.eq.s32.totalorder %s18, 0
    %s21 = sadd.s32 %s20, 1
    %s22 = scalar_select %p19, %s20, %s21
    %p25 = pneg %p19
    %p26 = scmp.eq.s32.totalorder %s10, 1
    %p27 = por %p25, %p26
    %p28 = scmp.ne.s32.totalorder %s20, %s23
    %p29 = scmp.eq.s32.totalorder %s10, 0
    %p30 = por %p28, %p29
    %p31 = scmp.ne.s32.totalorder %s20, %s23
    %p32 = scmp.eq.s32.totalorder %s15, 1
    %p33 = por %p31, %p32
    %p34 = scmp.ne.s32.totalorder %s23, %s24
    %p35 = scmp.eq.s32.totalorder %s15, 0
    %p36 = por %p34, %p35
    %p37 = scmp.ne.s32.totalorder %s23, %s24
    %p38 = scmp.eq.s32.totalorder %s16, 1
    %p39 = por %p37, %p38
    %p41 = scmp.ne.s32.totalorder %s24, %s40
    %p42 = scmp.eq.s32.totalorder %s16, 0
    %p43 = por %p41, %p42
    %s45 = sadd.s32 %s44, 1
    %p48 = scmp.eq.s32.totalorder %s10, 1
    %p49 = scmp.ne.s32.totalorder %s44, %s46
    %p50 = scmp.eq.s32.totalorder %s10, 0
    %p51 = por %p49, %p50
    %p52 = scmp.ne.s32.totalorder %s44, %s46
    %p53 = scmp.eq.s32.totalorder %s15, 1
    %p54 = por %p52, %p53
    %p55 = scmp.ne.s32.totalorder %s46, %s47
    %p56 = scmp.eq.s32.totalorder %s15, 0
    %p57 = por %p55, %p56
    %p58 = scmp.ne.s32.totalorder %s46, %s47
    %p59 = scmp.eq.s32.totalorder %s16, 1
    %p60 = por %p58, %p59
    %p62 = scmp.ne.s32.totalorder %s47, %s61
    %p63 = scmp.eq.s32.totalorder %s16, 0
    %p64 = por %p62, %p63
    %s66 = sadd.s32 %s65, 1
    %p69 = scmp.eq.s32.totalorder %s10, 1
    %p70 = scmp.ne.s32.totalorder %s65, %s67
    %p71 = scmp.eq.s32.totalorder %s10, 0
    %p72 = por %p70, %p71
    %p73 = scmp.ne.s32.totalorder %s65, %s67
    %p74 = scmp.eq.s32.totalorder %s15, 1
    %p75 = por %p73, %p74
    %p76 = scmp.ne.s32.totalorder %s67, %s68
    %p77 = scmp.eq.s32.totalorder %s15, 0
    %p78 = por %p76, %p77
    %p79 = scmp.ne.s32.totalorder %s67, %s68
    %p80 = scmp.eq.s32.totalorder %s16, 1
    %p81 = por %p79, %p80
    %p83 = scmp.ne.s32.totalorder %s68, %s82
    %p84 = scmp.eq.s32.totalorder %s16, 0
    %p85 = por %p83, %p84
    %s87 = sadd.s32 %s86, 1
    %p90 = scmp.eq.s32.totalorder %s10, 1
    %p91 = scmp.ne.s32.totalorder %s86, %s88
    %p92 = scmp.eq.s32.totalorder %s10, 0
    %p93 = por %p91, %p92
    %p94 = scmp.ne.s32.totalorder %s86, %s88
    %p95 = scmp.eq.s32.totalorder %s15, 1
    %p96 = por %p94, %p95
    %p97 = scmp.ne.s32.totalorder %s88, %s89
    %p98 = scmp.eq.s32.totalorder %s15, 0
    %p99 = por %p97, %p98
    %p100 = scmp.ne.s32.totalorder %s88, %s89
    %p101 = scmp.eq.s32.totalorder %s16, 1
    %p102 = por %p100, %p101
    %p104 = scmp.ne.s32.totalorder %s89, %s103
    %p105 = scmp.eq.s32.totalorder %s16, 0
    %p106 = por %p104, %p105
    %s107 = ssub.s32 %s10, %s17
    %p108 = scmp.eq.s32.totalorder %s107, 0
    %s110 = sadd.s32 %s109, 1
    %s111 = scalar_select %p108, %s109, %s110
    %p114 = pneg %p108
    %p115 = scmp.eq.s32.totalorder %s10, 1
    %p116 = por %p114, %p115
    %p117 = scmp.ne.s32.totalorder %s109, %s112
    %p118 = scmp.eq.s32.totalorder %s10, 0
    %p119 = por %p117, %p118
    %p120 = scmp.ne.s32.totalorder %s109, %s112
    %p121 = scmp.eq.s32.totalorder %s15, 1
    %p122 = por %p120, %p121
    %p123 = scmp.ne.s32.totalorder %s112, %s113
    %p124 = scmp.eq.s32.totalorder %s15, 0
    %p125 = por %p123, %p124
    %p126 = scmp.ne.s32.totalorder %s112, %s113
    %p127 = scmp.eq.s32.totalorder %s16, 1
    %p128 = por %p126, %p127
    %p130 = scmp.ne.s32.totalorder %s113, %s129
    %p131 = scmp.eq.s32.totalorder %s16, 0
    %p132 = por %p130, %p131
    %p133 = scmp.le.s32.totalorder 1, %s10
    %p134 = scmp.lt.s32.totalorder %s10, 3
    %p135 = pnand %p133, %p134
    %p136 = pneg %p135
    // Predicated region
    $region9: #{alamo_forward.1} parent=5 // pred_check
      _
    $region10: #{alamo_forward.1} parent=5 // pred_check_branch
      %138 = sbr.rel (%p135) target = $region12
    $region11: #{alamo_forward.1} parent=5 // pred_region
      %s139 = ssub.s32 %s10, 1
      // Predicated region
      $region13: #{alamo_forward.1} parent=11 // pred_check
        %p140 = pneg %p57
      $region14: #{alamo_forward.1} parent=11 // pred_check_branch
        %142 = sbr.rel (%p140) target = $region16
      $region15: #{alamo_forward.1} parent=11 // pred_region
        _
      $region16: #{alamo_forward.1} parent=11 // pred_fallthru
        _
      // Predicated region
      $region17: #{alamo_forward.1} parent=11 // pred_check
        %p143 = pneg %p78
      $region18: #{alamo_forward.1} parent=11 // pred_check_branch
        %145 = sbr.rel (%p143) target = $region20
      $region19: #{alamo_forward.1} parent=11 // pred_region
        _
      $region20: #{alamo_forward.1} parent=11 // pred_fallthru
        _
      // Predicated region
      $region21: #{alamo_forward.1} parent=11 // pred_check
        %p146 = pneg %p99
      $region22: #{alamo_forward.1} parent=11 // pred_check_branch
        %148 = sbr.rel (%p146) target = $region24
      $region23: #{alamo_forward.1} parent=11 // pred_region
        _
      $region24: #{alamo_forward.1} parent=11 // pred_fallthru
        _
    $region12: #{alamo_forward.1} parent=5 // pred_fallthru
      _
    %p149 = scmp.lt.s32.totalorder %s10, 2
    // Predicated region
    $region25: #{alamo_forward.1} parent=5 // pred_check
      %p150 = pneg %p149
    $region26: #{alamo_forward.1} parent=5 // pred_check_branch
      %152 = sbr.rel (%p150) target = $region28
    $region27: #{alamo_forward.1} parent=5 // pred_region
      // Predicated region
      $region29: #{alamo_forward.1} parent=27 // pred_check
        %p153 = pneg %p30
      $region30: #{alamo_forward.1} parent=27 // pred_check_branch
        %155 = sbr.rel (%p153) target = $region32
      $region31: #{alamo_forward.1} parent=27 // pred_region
        %p156 = scmp.lt.s32.totalorder %s10, 1
        %s157 = scalar_select %p156, %s10, 1
        %s158 = smul.addr %s157, 2
        %s159 = smul.addr %s158, 4
        %s160 = scalar_lea.vmem %s0, %s159
      $region32: #{alamo_forward.1} parent=27 // pred_fallthru
        _
    $region28: #{alamo_forward.1} parent=5 // pred_fallthru
      _
    %p161 = scmp.le.s32.totalorder 1, %s10
    %p162 = scmp.lt.s32.totalorder %s10, 3
    %p163 = pnand %p161, %p162
    %p164 = pneg %p163
    // Predicated region
    $region33: #{alamo_forward.1} parent=5 // pred_check
      _
    $region34: #{alamo_forward.1} parent=5 // pred_check_branch
      %166 = sbr.rel (%p163) target = $region36
    $region35: #{alamo_forward.1} parent=5 // pred_region
      %s167 = ssub.s32 %s10, 1
      %p168 = scmp.lt.s32.totalorder %s15, 1
      %s169 = scalar_select %p168, %s15, 1
      %s170 = smul.addr %s169, 2
      %s171 = smul.addr %s170, 4
      %s172 = scalar_lea.vmem %s0, %s171
      %p173 = pneg %p36
      %p174 = pneg %p33
      %p175 = pneg %p57
      %p176 = pneg %p54
      %p177 = pneg %p78
      %p178 = pneg %p75
      %p179 = pneg %p99
      %p180 = pneg %p96
      %p181 = pneg %p125
      %p182 = pneg %p122
      %p183 = scmp.lt.s32.totalorder %s15, 1
      %s184 = scalar_select %p183, %s15, 1
      %s185 = smul.addr %s184, 2
      %s186 = smul.addr %s185, 8
      %s187 = scalar_lea.vmem %s4, %s186
      %p188 = scmp.lt.s32.totalorder %s15, 1
      %s189 = scalar_select %p188, %s15, 1
      %s190 = smul.addr %s189, 2
      %s191 = smul.addr %s190, 4
      %s192 = scalar_lea.vmem %s0, %s191
      %p193 = scmp.lt.s32.totalorder %s15, 1
      %s194 = scalar_select %p193, %s15, 1
      %s195 = smul.addr %s194, 2
      %s196 = smul.addr %s195, 8
      %s197 = scalar_lea.vmem %s4, %s196
      %v199 = vld [vmem:[%s192] sm:$0xff]
      %v201 = vcombine.high %v199, %v199
      %203 = vrot.lane.b32.xlu0 %v199, 17
      %v204 = vpop.permute.xlu0 %203
      %205 = vrot.lane.b32.xlu0 %v201, 17
      %v206 = vpop.permute.xlu0 %205
      %v207 = vlaneseq
      %v208 = vand.u32 %v207, 127
      %vm209 = vcmp.lt.s32.totalorder %v208, 17
      %v210 = vsel %vm209, %v204, %v206
      %v211 = vsel %vm209, %v206, %v204
      %v212 = vld [vmem:[%s3] sm:$0x3]
      %v214 = vlaneseq
      %v215 = vshrl.u32 %v214, 7
      %v216 = vsub.s32 0, %v215
      %v217 = vrot.slane %v212, %v216
      %v218 = vlaneseq
      %v219 = vshrl.u32 %v218, 7
      %v220 = vsub.s32 1, %v219
      %v221 = vrot.slane %v212, %v220
      %v224 = vmul.f32 %v211, %v217
      %v225 = vmul.f32 %v210, %v221
      %226 = vrot.lane.b32.xlu0 %v199, 16
      %v227 = vpop.permute.xlu0 %226
      %228 = vrot.lane.b32.xlu0 %v201, 16
      %v229 = vpop.permute.xlu0 %228
      %vm230 = vcmp.lt.s32.totalorder %v208, 16
      %v231 = vsel %vm230, %v227, %v229
      %v232 = vsel %vm230, %v229, %v227
      %s233 = scalar_lea.vmem %s3, 2
      %v234 = vld [vmem:[%s233] sm:$0x3]
      %v236 = vlaneseq
      %v237 = vshrl.u32 %v236, 7
      %v238 = vsub.s32 0, %v237
      %v239 = vrot.slane %v234, %v238
      %v240 = vlaneseq
      %v241 = vshrl.u32 %v240, 7
      %v242 = vsub.s32 1, %v241
      %v243 = vrot.slane %v234, %v242
      %v246 = vmul.f32 %v232, %v239
      %v247 = vmul.f32 %v231, %v243
      %248 = vrot.lane.b32.xlu0 %v199, 15
      %v249 = vpop.permute.xlu0 %248
      %250 = vrot.lane.b32.xlu0 %v201, 15
      %v251 = vpop.permute.xlu0 %250
      %vm252 = vcmp.lt.s32.totalorder %v208, 15
      %v253 = vsel %vm252, %v249, %v251
      %v254 = vsel %vm252, %v251, %v249
      %s255 = scalar_lea.vmem %s3, 4
      %v256 = vld [vmem:[%s255] sm:$0x3]
      %v258 = vlaneseq
      %v259 = vshrl.u32 %v258, 7
      %v260 = vsub.s32 0, %v259
      %v261 = vrot.slane %v256, %v260
      %v262 = vlaneseq
      %v263 = vshrl.u32 %v262, 7
      %v264 = vsub.s32 1, %v263
      %v265 = vrot.slane %v256, %v264
      %v268 = vmul.f32 %v254, %v261
      %v269 = vmul.f32 %v253, %v265
      %270 = vrot.lane.b32.xlu0 %v199, 1
      %v271 = vpop.permute.xlu0 %270
      %272 = vrot.lane.b32.xlu0 %v201, 1
      %v273 = vpop.permute.xlu0 %272
      %vm274 = vcmp.lt.s32.totalorder %v208, 1
      %v275 = vsel %vm274, %v271, %v273
      %v276 = vsel %vm274, %v273, %v271
      %s277 = scalar_lea.vmem %s3, 6
      %v278 = vld [vmem:[%s277] sm:$0x3]
      %v280 = vlaneseq
      %v281 = vshrl.u32 %v280, 7
      %v282 = vsub.s32 0, %v281
      %v283 = vrot.slane %v278, %v282
      %v284 = vlaneseq
      %v285 = vshrl.u32 %v284, 7
      %v286 = vsub.s32 1, %v285
      %v287 = vrot.slane %v278, %v286
      %v290 = vmul.f32 %v276, %v283
      %v291 = vmul.f32 %v275, %v287
      %292 = vrot.lane.b32.xlu0 %v199, 127
      %v293 = vpop.permute.xlu0 %292
      %294 = vrot.lane.b32.xlu0 %v201, 127
      %v295 = vpop.permute.xlu0 %294
      %vm296 = vcmp.lt.s32.totalorder %v208, 127
      %v297 = vsel %vm296, %v293, %v295
      %v298 = vsel %vm296, %v295, %v293
      %s299 = scalar_lea.vmem %s3, 10
      %v300 = vld [vmem:[%s299] sm:$0x3]
      %v302 = vlaneseq
      %v303 = vshrl.u32 %v302, 7
      %v304 = vsub.s32 0, %v303
      %v305 = vrot.slane %v300, %v304
      %v306 = vlaneseq
      %v307 = vshrl.u32 %v306, 7
      %v308 = vsub.s32 1, %v307
      %v309 = vrot.slane %v300, %v308
      %v312 = vmul.f32 %v297, %v305
      %v313 = vmul.f32 %v298, %v309
      %314 = vrot.lane.b32.xlu0 %v199, 113
      %v315 = vpop.permute.xlu0 %314
      %316 = vrot.lane.b32.xlu0 %v201, 113
      %v317 = vpop.permute.xlu0 %316
      %vm318 = vcmp.lt.s32.totalorder %v208, 113
      %v319 = vsel %vm318, %v315, %v317
      %v320 = vsel %vm318, %v317, %v315
      %s321 = scalar_lea.vmem %s3, 12
      %v322 = vld [vmem:[%s321] sm:$0x3]
      %v324 = vlaneseq
      %v325 = vshrl.u32 %v324, 7
      %v326 = vsub.s32 0, %v325
      %v327 = vrot.slane %v322, %v326
      %v328 = vlaneseq
      %v329 = vshrl.u32 %v328, 7
      %v330 = vsub.s32 1, %v329
      %v331 = vrot.slane %v322, %v330
      %v334 = vmul.f32 %v319, %v327
      %v335 = vmul.f32 %v320, %v331
      %336 = vrot.lane.b32.xlu0 %v199, 112
      %v337 = vpop.permute.xlu0 %336
      %338 = vrot.lane.b32.xlu0 %v201, 112
      %v339 = vpop.permute.xlu0 %338
      %vm340 = vcmp.lt.s32.totalorder %v208, 112
      %v341 = vsel %vm340, %v337, %v339
      %v342 = vsel %vm340, %v339, %v337
      %s343 = scalar_lea.vmem %s3, 14
      %v344 = vld [vmem:[%s343] sm:$0x3]
      %v346 = vlaneseq
      %v347 = vshrl.u32 %v346, 7
      %v348 = vsub.s32 0, %v347
      %v349 = vrot.slane %v344, %v348
      %v350 = vlaneseq
      %v351 = vshrl.u32 %v350, 7
      %v352 = vsub.s32 1, %v351
      %v353 = vrot.slane %v344, %v352
      %v356 = vmul.f32 %v341, %v349
      %v357 = vmul.f32 %v342, %v353
      %358 = vrot.lane.b32.xlu0 %v199, 111
      %v359 = vpop.permute.xlu0 %358
      %360 = vrot.lane.b32.xlu0 %v201, 111
      %v361 = vpop.permute.xlu0 %360
      %vm362 = vcmp.lt.s32.totalorder %v208, 111
      %v363 = vsel %vm362, %v359, %v361
      %v364 = vsel %vm362, %v361, %v359
      %s365 = scalar_lea.vmem %s3, 16
      %v366 = vld [vmem:[%s365] sm:$0x3]
      %v368 = vlaneseq
      %v369 = vshrl.u32 %v368, 7
      %v370 = vsub.s32 0, %v369
      %v371 = vrot.slane %v366, %v370
      %v372 = vlaneseq
      %v373 = vshrl.u32 %v372, 7
      %v374 = vsub.s32 1, %v373
      %v375 = vrot.slane %v366, %v374
      %v378 = vmul.f32 %v363, %v371
      %v379 = vmul.f32 %v364, %v375
      %v382 = vrot.slane %v246, 4
      %v383 = vrot.slane %v247, 4
      %v388 = vrot.slane %v290, 4
      %v389 = vrot.slane %v291, 4
      %v394 = vrot.slane %v312, 4
      %v395 = vrot.slane %v313, 4
      %v400 = vrot.slane %v356, 4
      %v401 = vrot.slane %v357, 4
      %vm404 = vcmask 1043456
      %v405 = vsel %vm404, %v224, %v382
      %v406 = vsel %vm404, %v225, %v383
      %v407 = vsel %vm404, %v268, %v388
      %v408 = vsel %vm404, %v269, %v389
      %v409 = vsel %vm404, %v199, %v394
      %v410 = vsel %vm404, %v201, %v395
      %v411 = vsel %vm404, %v334, %v400
      %v412 = vsel %vm404, %v335, %v401
      %v413 = vpack.c.bf16 %v407, %v405
      %v414 = vpack.c.bf16 %v408, %v406
      %v415 = vpack.c.bf16 %v411, %v409
      %v416 = vpack.c.bf16 %v412, %v410
      %v417 = vpack.c.bf16 %v378, %v378
      %v418 = vpack.c.bf16 %v379, %v379
      %v419 = vld [vmem:[%s1] sm:$0xf]
      %v420 = vld [vmem:[%s2] sm:$0xff]
      %422 = vset.pattern.permute.xlu0 0
      %423 = vperm.xlu0 %422, %v420
      %v424 = vpop.permute.xlu0 %423
      %vm426 = vcmask 293888
      %v428 = vsel %vm426, %v419, 0
      %vm430 = vcmask 1041408
      %v432 = vsel %vm430, %v417, 0
      %v435 = vsel %vm430, %v418, 0
      %437 = vmatprep.subr.bf16.mxu0 %v414
      %438 = vmatpush1.bf16.msra.mxu0 %v413
      %439 = vmatprep.subr.bf16.mxu0 %v416
      %440 = vmatpush1.bf16.msra.mxu0 %v415
      %441 = vmatprep.subr.bf16.mxu0 %v435
      %442 = vmatpush1.bf16.msra.mxu0 %v432
      %443 = vmatprep.subr.bf16.mxu0 0
      %444 = vmatpush1.bf16.msra.mxu0 0
      %445 = vmatprep.subr.bf16.mxu0 0
      %446 = vmatpush1.bf16.msra.mxu0 0
      %447 = vmatprep.subr.bf16.mxu0 0
      %448 = vmatpush1.bf16.msra.mxu0 0
      %449 = vmatprep.subr.bf16.mxu0 0
      %450 = vmatpush1.bf16.msra.mxu0 0
      %451 = vmatprep.subr.bf16.mxu0 0
      %452 = vmatpush1.bf16.msra.mxu0 0
      %453 = vmatprep.subr.bf16.mxu0 0
      %454 = vmatpush1.bf16.msra.mxu0 0
      %455 = vmatprep.subr.bf16.mxu0 0
      %456 = vmatpush1.bf16.msra.mxu0 0
      %457 = vmatprep.subr.bf16.mxu0 0
      %458 = vmatpush1.bf16.msra.mxu0 0
      %459 = vmatprep.subr.bf16.mxu0 0
      %460 = vmatpush1.bf16.msra.mxu0 0
      %461 = vmatprep.subr.bf16.mxu0 0
      %462 = vmatpush1.bf16.msra.mxu0 0
      %463 = vmatprep.subr.bf16.mxu0 0
      %464 = vmatpush1.bf16.msra.mxu0 0
      %465 = vmatprep.subr.bf16.mxu0 0
      %466 = vmatpush1.bf16.msra.mxu0 0
      %467 = vmatprep.subr.bf16.mxu0 0
      %468 = vmatpush1.bf16.msra.mxu0 0
      %469 = vmatprep.mubr.bf16.mxu0 0
      %470 = vmatmul.mubr.bf16.gmra.mrb[0].mxu0 %v428
      %v471 = vpop.f32.mrb[0].mxu0
      %v472 = vadd.f32 %v424, %v471
      %v473 = vpop.f32.mrb[0].mxu0
      %v474 = vadd.f32 %v424, %v473
      %v475 = vpop.f32.mrb[0].mxu0
      %v476 = vpop.f32.mrb[0].mxu0
      %477 = vdwg.mxu0
      %v478 = vmax.f32 %v472, 0.0
      %v479 = vmax.f32 %v474, 0.0
      %480 = vst [vmem:[%s197] sm:$0xff] %v478
      %481 = vst [vmem:[%s197 + $0x8] sm:$0xff] %v479
      %p482 = scmp.lt.s32.totalorder %s15, 1
      %s483 = scalar_select %p482, %s15, 1
      %s484 = smul.addr %s483, 2
      %s485 = smul.addr %s484, 8
      %s486 = scalar_lea.vmem %s4, %s485
      // Predicated region
      $region37: #{alamo_forward.1} parent=35 // pred_check
        %p487 = pneg %p122
      $region38: #{alamo_forward.1} parent=35 // pred_check_branch
        %489 = sbr.rel (%p487) target = $region40
      $region39: #{alamo_forward.1} parent=35 // pred_region
        _
      $region40: #{alamo_forward.1} parent=35 // pred_fallthru
        _
    $region36: #{alamo_forward.1} parent=5 // pred_fallthru
      _
    %p490 = scmp.le.s32.totalorder 2, %s10
    // Predicated region
    $region41: #{alamo_forward.1} parent=5 // pred_check
      %p491 = pneg %p490
    $region42: #{alamo_forward.1} parent=5 // pred_check_branch
      %493 = sbr.rel (%p491) target = $region44
    $region43: #{alamo_forward.1} parent=5 // pred_region
      %s494 = ssub.s32 %s10, 2
      // Predicated region
      $region45: #{alamo_forward.1} parent=43 // pred_check
        %p495 = pneg %p128
      $region46: #{alamo_forward.1} parent=43 // pred_check_branch
        %497 = sbr.rel (%p495) target = $region48
      $region47: #{alamo_forward.1} parent=43 // pred_region
        %p498 = scmp.lt.s32.totalorder %s16, 1
        %s499 = scalar_select %p498, %s16, 1
        %s500 = smul.addr %s499, 2
        %s501 = smul.addr %s500, 8
        %s502 = scalar_lea.vmem %s4, %s501
      $region48: #{alamo_forward.1} parent=43 // pred_fallthru
        _
    $region44: #{alamo_forward.1} parent=5 // pred_fallthru
      _
  $region6: #{alamo_forward.1} parent=0 // loop_footer
    %s14 = sadd.s32 1, %s10
  $region7: #{alamo_forward.1} parent=0 // loop_footer_branch
    %9 = sbr.rel target = $region3
  $region8: #{alamo_forward.1} parent=0 // loop_exit
    _

</llo_original>
